<compile_context>
chip_gen: v6e
topology: v6e:2x2x1
jax: 0.10.0
libtpu: 0.0.40
codegen_flags: <defaults>
</compile_context>

<pallas_src>
import math
import functools

import jax
import jax.numpy as jnp
from jax import lax
from jax.experimental import pallas as pl
from jax.experimental.pallas import tpu as pltpu


# ----------------------------------------------------------------------------
# Per-generation VMEM budget & tile targets
# ----------------------------------------------------------------------------

def _vmem_limit_bytes():
    try:
        info = pltpu.get_tpu_info()
        phys = int(getattr(info, "vmem_capacity_bytes", 0)) or (64 * 1024 * 1024)
    except Exception:
        phys = 64 * 1024 * 1024          # conservative fallback (v7x-sized)
    # leave ~25% headroom for compiler scratch / double buffering
    return min((phys * 3) // 4, 112 * 1024 * 1024)


_VMEM_LIMIT = _vmem_limit_bytes()

if _VMEM_LIMIT >= 64 * 1024 * 1024:           # v5e / v6e (128 MiB physical)
    _TM_TARGET, _TN_TARGET, _TK_TARGET = 512, 512, 512
else:                                         # v7x (64 MiB physical)
    _TM_TARGET, _TN_TARGET, _TK_TARGET = 256, 256, 512


def _pick_tile(dim, target, quantum):
    """Largest power-of-two-scaled divisor of `dim` that is <= target and a
    multiple of `quantum`; falls back to the full dim (always a legal block)."""
    # TODO(synk): the full-dim fallback can produce a very large block for awkward
    # (non-power-of-two) dims; acceptable for the shapes used here.
    if dim <= target:
        return dim
    t = target
    while t >= quantum:
        if dim % t == 0:
            return t
        t //= 2
    return dim


# ----------------------------------------------------------------------------
# Pallas kernels
# ----------------------------------------------------------------------------

def _linear_kernel(x_ref, w_ref, b_ref, o_ref, acc_ref, *, activation):
    """o = act(x @ w + b); bf16 MXU operands, f32 accumulator scratch."""
    @pl.when(pl.program_id(2) == 0)
    def _init():
        acc_ref[...] = jnp.zeros_like(acc_ref)

    acc_ref[...] += jnp.dot(x_ref[...].astype(jnp.bfloat16),
                            w_ref[...].astype(jnp.bfloat16),
                            preferred_element_type=jnp.float32)

    @pl.when(pl.program_id(2) == pl.num_programs(2) - 1)
    def _fin():
        y = acc_ref[...] + b_ref[...].astype(jnp.float32)
        if activation == "gelu":
            y = jax.nn.gelu(y, approximate=True)    # tanh form -> EUP slot
        o_ref[...] = y.astype(o_ref.dtype)


def pallas_linear(x2d, w, b, activation=None, out_dtype=None):
    """x2d: [N, Din] @ w: [Din, Dout] + b, optional fused GELU epilogue."""
    N, Din = x2d.shape
    Dout = w.shape[1]
    tm = _pick_tile(N, _TM_TARGET, 16)          # 16: bf16 sublane packing
    tn = _pick_tile(Dout, _TN_TARGET, 128)
    tk = _pick_tile(Din, _TK_TARGET, 128)
    kernel = functools.partial(_linear_kernel, activation=activation)
    return pl.pallas_call(
        kernel,
        out_shape=jax.ShapeDtypeStruct((N, Dout), out_dtype or x2d.dtype),
        grid=(N // tm, Dout // tn, Din // tk),
        in_specs=[
            pl.BlockSpec((tm, tk), lambda i, j, k: (i, k)),
            pl.BlockSpec((tk, tn), lambda i, j, k: (k, j)),
            pl.BlockSpec((1, tn), lambda i, j, k: (0, j)),
        ],
        out_specs=pl.BlockSpec((tm, tn), lambda i, j, k: (i, j)),
        scratch_shapes=[pltpu.VMEM((tm, tn), jnp.float32)],
        compiler_params=pltpu.CompilerParams(
            dimension_semantics=("parallel", "parallel", "arbitrary"),
            vmem_limit_bytes=_VMEM_LIMIT),
    )(x2d, w, b.reshape(1, Dout))


def _linear_res_ln_kernel(x_ref, w_ref, b_ref, res_ref, g_ref, be_ref,
                          o_ref, acc_ref, *, eps):
    """o = LayerNorm(res + x @ w + b) * gamma + beta (f32 LN statistics)."""
    @pl.when(pl.program_id(1) == 0)
    def _init():
        acc_ref[...] = jnp.zeros_like(acc_ref)

    acc_ref[...] += jnp.dot(x_ref[...].astype(jnp.bfloat16),
                            w_ref[...].astype(jnp.bfloat16),
                            preferred_element_type=jnp.float32)

    @pl.when(pl.program_id(1) == pl.num_programs(1) - 1)
    def _fin():
        y = (acc_ref[...] + b_ref[...].astype(jnp.float32)
             + res_ref[...].astype(jnp.float32))
        mu = jnp.mean(y, axis=-1, keepdims=True)
        var = jnp.mean((y - mu) ** 2, axis=-1, keepdims=True)   # biased, as torch
        yn = (y - mu) * lax.rsqrt(var + eps)
        o_ref[...] = (yn * g_ref[...] + be_ref[...]).astype(o_ref.dtype)


def pallas_linear_residual_ln(x2d, w, b, residual, gamma, beta, eps=1e-5):
    """Fused: LayerNorm(residual + x2d @ w + b)."""
    N, Din = x2d.shape
    Dout = w.shape[1]
    tm = _pick_tile(N, _TM_TARGET, 16)
    tk = _pick_tile(Din, _TK_TARGET, 128)
    kernel = functools.partial(_linear_res_ln_kernel, eps=eps)
    return pl.pallas_call(
        kernel,
        out_shape=jax.ShapeDtypeStruct((N, Dout), residual.dtype),
        grid=(N // tm, Din // tk),
        in_specs=[
            pl.BlockSpec((tm, tk), lambda i, k: (i, k)),
            pl.BlockSpec((tk, Dout), lambda i, k: (k, 0)),
            pl.BlockSpec((1, Dout), lambda i, k: (0, 0)),
            pl.BlockSpec((tm, Dout), lambda i, k: (i, 0)),
            pl.BlockSpec((1, Dout), lambda i, k: (0, 0)),
            pl.BlockSpec((1, Dout), lambda i, k: (0, 0)),
        ],
        out_specs=pl.BlockSpec((tm, Dout), lambda i, k: (i, 0)),
        scratch_shapes=[pltpu.VMEM((tm, Dout), jnp.float32)],
        compiler_params=pltpu.CompilerParams(
            dimension_semantics=("parallel", "arbitrary"),
            vmem_limit_bytes=_VMEM_LIMIT),
    )(x2d, w, b.reshape(1, Dout), residual,
      gamma.reshape(1, Dout), beta.reshape(1, Dout))


def _ffn_res_ln_kernel(x_ref, w1_ref, b1_ref, w2_ref, b2_ref, g_ref, be_ref,
                       o_ref, *, eps):
    """o = LayerNorm(x + GELU(x@W1+b1)@W2 + b2); the hidden activation never
    leaves VMEM/vregs.  W1, W2 stay resident (constant index_map)."""
    x = x_ref[...].astype(jnp.float32)
    h = jnp.dot(x.astype(jnp.bfloat16), w1_ref[...].astype(jnp.bfloat16),
                preferred_element_type=jnp.float32)
    h = h + b1_ref[...].astype(jnp.float32)
    h = jax.nn.gelu(h, approximate=True)
    y = jnp.dot(h.astype(jnp.bfloat16), w2_ref[...].astype(jnp.bfloat16),
                preferred_element_type=jnp.float32)
    y = y + b2_ref[...].astype(jnp.float32) + x            # residual
    mu = jnp.mean(y, axis=-1, keepdims=True)
    var = jnp.mean((y - mu) ** 2, axis=-1, keepdims=True)
    yn = (y - mu) * lax.rsqrt(var + eps)
    o_ref[...] = (yn * g_ref[...] + be_ref[...]).astype(o_ref.dtype)


def pallas_ffn_residual_ln(x2d, w1, b1, w2, b2, gamma, beta, eps=1e-5):
    """Fused position-wise FFN + residual + LayerNorm (no HBM hidden round-trip)."""
    N, D = x2d.shape
    Hd = w1.shape[1]
    weight_bytes = w1.size * w1.dtype.itemsize + w2.size * w2.dtype.itemsize
    if 3 * weight_bytes > _VMEM_LIMIT:
        # Fallback: weights too large to keep resident -> two K-tiled kernels.
        h = pallas_linear(x2d, w1, b1, activation="gelu")
        return pallas_linear_residual_ln(h, w2, b2, residual=x2d,
                                         gamma=gamma, beta=beta, eps=eps)

    tm = _pick_tile(N, min(_TM_TARGET, 256), 16)
    kernel = functools.partial(_ffn_res_ln_kernel, eps=eps)
    return pl.pallas_call(
        kernel,
        out_shape=jax.ShapeDtypeStruct((N, D), x2d.dtype),
        grid=(N // tm,),
        in_specs=[
            pl.BlockSpec((tm, D), lambda i: (i, 0)),
            pl.BlockSpec((D, Hd), lambda i: (0, 0)),
            pl.BlockSpec((1, Hd), lambda i: (0, 0)),
            pl.BlockSpec((Hd, D), lambda i: (0, 0)),
            pl.BlockSpec((1, D), lambda i: (0, 0)),
            pl.BlockSpec((1, D), lambda i: (0, 0)),
            pl.BlockSpec((1, D), lambda i: (0, 0)),
        ],
        out_specs=pl.BlockSpec((tm, D), lambda i: (i, 0)),
        compiler_params=pltpu.CompilerParams(
            dimension_semantics=("parallel",),
            vmem_limit_bytes=_VMEM_LIMIT),
    )(x2d, w1, b1.reshape(1, Hd), w2, b2.reshape(1, D),
      gamma.reshape(1, D), beta.reshape(1, D))


def _layernorm_kernel(x_ref, g_ref, b_ref, o_ref, *, eps):
    x = x_ref[...].astype(jnp.float32)
    mu = jnp.mean(x, axis=-1, keepdims=True)
    var = jnp.mean((x - mu) ** 2, axis=-1, keepdims=True)
    y = (x - mu) * lax.rsqrt(var + eps)
    o_ref[...] = (y * g_ref[...] + b_ref[...]).astype(o_ref.dtype)


def pallas_layernorm(x2d, gamma, beta, eps=1e-5):
    """Row-wise LayerNorm over the last dim of x2d (embedding LN)."""
    N, D = x2d.shape
    tm = _pick_tile(N, _TM_TARGET, 16)
    kernel = functools.partial(_layernorm_kernel, eps=eps)
    return pl.pallas_call(
        kernel,
        out_shape=jax.ShapeDtypeStruct((N, D), x2d.dtype),
        grid=(N // tm,),
        in_specs=[
            pl.BlockSpec((tm, D), lambda i: (i, 0)),
            pl.BlockSpec((1, D), lambda i: (0, 0)),
            pl.BlockSpec((1, D), lambda i: (0, 0)),
        ],
        out_specs=pl.BlockSpec((tm, D), lambda i: (i, 0)),
        compiler_params=pltpu.CompilerParams(
            dimension_semantics=("parallel",),
            vmem_limit_bytes=_VMEM_LIMIT),
    )(x2d, gamma.reshape(1, D), beta.reshape(1, D))


def _attention_kernel(qkv_ref, mask_ref, ctx_ref, p_ref, *, head_dim, causal,
                      seq_len):
    """One (batch, head) per grid step.

    qkv_ref : [1, 1, 3, S, dh]  (q/k/v stacked; 1/sqrt(dh) folded into q weights)
    mask_ref: [1, 1, 1, S]      key-padding mask (1.0 keep, 0.0 masked)
    """
    q = qkv_ref[0, 0, 0]                                  # [S, dh] bf16
    k = qkv_ref[0, 0, 1]
    v = qkv_ref[0, 0, 2]

    s = jnp.dot(q, k.T, preferred_element_type=jnp.float32)       # [S, S] f32

    keep = mask_ref[0, 0] > 0.0                                   # [1, S]
    if causal:
        row = lax.broadcasted_iota(jnp.int32, (seq_len, seq_len), 0)
        col = lax.broadcasted_iota(jnp.int32, (seq_len, seq_len), 1)
        valid = (col <= row) & keep
    else:
        valid = jnp.broadcast_to(keep, (seq_len, seq_len))
    s = jnp.where(valid, s, jnp.float32(-1e30))

    m = jnp.max(s, axis=-1, keepdims=True)
    e = jnp.exp(s - m)
    denom = jnp.sum(e, axis=-1, keepdims=True)
    p = e / denom                             # exact: stored filters sum to 1
    p_ref[0, 0] = p.astype(p_ref.dtype)

    ctx = jnp.dot(p.astype(jnp.bfloat16), v, preferred_element_type=jnp.float32)
    ctx_ref[0, 0] = ctx.astype(ctx_ref.dtype)


def pallas_attention(qkv, key_mask, *, causal=True, probs_dtype=jnp.float32):
    """qkv: [B, H, 3, S, dh]; key_mask: [B, 1, 1, S] float.
    Returns (context [B, H, S, dh] bf16, probs [B, H, S, S])."""
    B, H, _, S, dh = qkv.shape
    kernel = functools.partial(_attention_kernel, head_dim=dh, causal=causal,
                               seq_len=S)
    return pl.pallas_call(
        kernel,
        out_shape=(
            jax.ShapeDtypeStruct((B, H, S, dh), jnp.bfloat16),
            jax.ShapeDtypeStruct((B, H, S, S), probs_dtype),
        ),
        grid=(B, H),
        in_specs=[
            pl.BlockSpec((1, 1, 3, S, dh), lambda b, h: (b, h, 0, 0, 0)),
            pl.BlockSpec((1, 1, 1, S), lambda b, h: (b, 0, 0, 0)),
        ],
        out_specs=(
            pl.BlockSpec((1, 1, S, dh), lambda b, h: (b, h, 0, 0)),
            pl.BlockSpec((1, 1, S, S), lambda b, h: (b, h, 0, 0)),
        ),
        compiler_params=pltpu.CompilerParams(
            dimension_semantics=("parallel", "parallel"),   # >=2 units even at B=1
            vmem_limit_bytes=_VMEM_LIMIT),
    )(qkv, key_mask)


# ----------------------------------------------------------------------------
# Parameter construction (deterministic, synthetic)
# ----------------------------------------------------------------------------

def _pack_qkv(wq, wk, wv, bq, bk, bv, num_heads, scale):
    """Pack fused QKV weights head-major: columns = (head, {q,k,v}, dh).
    The 1/sqrt(dh) attention scale is folded into the q projection."""
    D = wq.shape[0]
    dh = D // num_heads
    wqh = (wq * scale).reshape(D, num_heads, dh)
    wkh = wk.reshape(D, num_heads, dh)
    wvh = wv.reshape(D, num_heads, dh)
    w = jnp.stack([wqh, wkh, wvh], axis=2).reshape(D, 3 * D)        # [D, H*3*dh]
    bqh = (bq * scale).reshape(num_heads, dh)
    bkh = bk.reshape(num_heads, dh)
    bvh = bv.reshape(num_heads, dh)
    b = jnp.stack([bqh, bkh, bvh], axis=1).reshape(3 * D)
    return w, b


def init_params(key, vocab_size, embedding_dim, hidden_dim, num_layers,
                max_position_embeddings, num_token_types, num_heads):
    def nrm(k, shape, std=0.02):
        return (std * jax.random.normal(k, shape)).astype(jnp.float32)

    keys = jax.random.split(key, 4 + num_layers)
    D, Hd = embedding_dim, hidden_dim
    dh = D // num_heads
    scale = 1.0 / math.sqrt(dh)

    tok_emb = nrm(keys[0], (vocab_size, D)).at[0].set(0.0)          # padding_idx=0
    pos_emb = nrm(keys[1], (max_position_embeddings, D)).at[0].set(0.0)  # pad pos=0
    typ_emb = nrm(keys[2], (num_token_types, D))

    params = {
        "tok_emb": tok_emb, "pos_emb": pos_emb, "typ_emb": typ_emb,
        "emb_ln_g": jnp.ones((D,), jnp.float32),
        "emb_ln_b": jnp.zeros((D,), jnp.float32),
        "layers": [],
    }
    for li in range(num_layers):
        lk = jax.random.split(keys[4 + li], 8)
        wq, wk, wv = nrm(lk[0], (D, D)), nrm(lk[1], (D, D)), nrm(lk[2], (D, D))
        bq = bk = bv = jnp.zeros((D,), jnp.float32)
        w_qkv, b_qkv = _pack_qkv(wq, wk, wv, bq, bk, bv, num_heads, scale)
        layer = {
            # matmul weights stored in bf16 (MXU-native); biases / LN params f32
            "w_qkv": w_qkv.astype(jnp.bfloat16), "b_qkv": b_qkv,
            "wo": nrm(lk[3], (D, D)).astype(jnp.bfloat16),
            "bo": jnp.zeros((D,), jnp.float32),
            "ln1_g": jnp.ones((D,), jnp.float32),
            "ln1_b": jnp.zeros((D,), jnp.float32),
            "w1": nrm(lk[4], (D, Hd)).astype(jnp.bfloat16),
            "b1": jnp.zeros((Hd,), jnp.float32),
            "w2": nrm(lk[5], (Hd, D)).astype(jnp.bfloat16),
            "b2": jnp.zeros((D,), jnp.float32),
            "ln2_g": jnp.ones((D,), jnp.float32),
            "ln2_b": jnp.zeros((D,), jnp.float32),
        }
        params["layers"].append(layer)
    return params


# ----------------------------------------------------------------------------
# Encoder forward (gathers are XLA glue; all hot paths are fused Pallas kernels)
# ----------------------------------------------------------------------------

def encoder_forward(params, input_ids, num_heads, token_type_ids=None,
                    padding_mask=None, causal_attn=True,
                    attn_probs_dtype=jnp.float32):
    B, S = input_ids.shape
    D = params["tok_emb"].shape[1]
    assert D % num_heads == 0
    dh = D // num_heads
    N = B * S

    # ---- Embedding (gather in XLA; LayerNorm is a Pallas kernel) -----------
    positions = jnp.broadcast_to(jnp.arange(1, S + 1, dtype=jnp.int32), (B, S))
    if padding_mask is not None:
        positions = jnp.where(padding_mask.astype(bool), positions, 0)
    if token_type_ids is None:
        token_type_ids = jnp.ones((B, S), dtype=jnp.int32)  # pad_token_type=0

    emb = (jnp.take(params["tok_emb"], input_ids, axis=0)
           + jnp.take(params["pos_emb"], positions, axis=0)
           + jnp.take(params["typ_emb"], token_type_ids, axis=0))
    x2d = pallas_layernorm(emb.reshape(N, D),
                           params["emb_ln_g"], params["emb_ln_b"])
    # embedding dropout: identity (eval mode)

    # key-padding mask for attention scores (1.0 keep, 0.0 masked)
    if padding_mask is None:
        key_mask = jnp.ones((B, 1, 1, S), jnp.float32)
    else:
        key_mask = padding_mask.astype(jnp.float32).reshape(B, 1, 1, S)

    emb_all_layers = []
    attn_filters_all_layers = []

    for lp in params["layers"]:
        # ------------------ Multi-head self-attention ----------------------
        qkv2d = pallas_linear(x2d, lp["w_qkv"], lp["b_qkv"],
                              out_dtype=jnp.bfloat16)          # [N, 3D]
        # head-major packing -> [B, H, 3, S, dh]; per-head block-level DMA
        qkv = qkv2d.reshape(B, S, num_heads, 3, dh).transpose(0, 2, 3, 1, 4)
        ctx, attn_probs = pallas_attention(qkv, key_mask, causal=causal_attn,
                                           probs_dtype=attn_probs_dtype)
        ctx2d = ctx.transpose(0, 2, 1, 3).reshape(N, D)         # merge heads

        # out-projection + residual + LayerNorm (attn dropout: identity)
        x2d = pallas_linear_residual_ln(
            ctx2d, lp["wo"], lp["bo"], residual=x2d,
            gamma=lp["ln1_g"], beta=lp["ln1_b"])

        # ------------------ Position-wise feed-forward ----------------------
        x2d = pallas_ffn_residual_ln(
            x2d, lp["w1"], lp["b1"], lp["w2"], lp["b2"],
            lp["ln2_g"], lp["ln2_b"])

        emb_all_layers.append(x2d.reshape(B, S, D))
        attn_filters_all_layers.append(attn_probs)

    return emb_all_layers, attn_filters_all_layers


# ----------------------------------------------------------------------------
# Main
# ----------------------------------------------------------------------------

if __name__ == "__main__":
    VOCAB = 100
    B, S = 2, 8
    D = 32                 # embedding_dim
    HIDDEN = 64            # hidden_dim
    HEADS = 4              # num_attn_heads
    LAYERS = 2             # num_enc_layers
    MAX_POS = S + 1        # pad_position=0 reserved (mirrors 1025 = 1024 + 1)
    TYPES = 2

    key = jax.random.PRNGKey(0)
    pkey, ikey = jax.random.split(key)
    params = init_params(pkey, VOCAB, D, HIDDEN, LAYERS, MAX_POS, TYPES, HEADS)

    input_ids = jax.random.randint(ikey, (B, S), minval=1, maxval=VOCAB,
                                   dtype=jnp.int32)
    # mark the last token of batch 0 as padding to exercise the key-padding mask
    padding_mask = jnp.ones((B, S), jnp.int32).at[0, S - 1].set(0)

    emb_all, attn_all = encoder_forward(params, input_ids, num_heads=HEADS,
                                        padding_mask=padding_mask,
                                        causal_attn=True)

    jax.block_until_ready(emb_all)
    jax.block_until_ready(attn_all)

    assert len(emb_all) == LAYERS and len(attn_all) == LAYERS
    assert emb_all[0].shape == (B, S, D)
    assert attn_all[0].shape == (B, HEADS, S, S)
    assert all(bool(jnp.all(jnp.isfinite(e))) for e in emb_all)
    assert all(bool(jnp.all(jnp.isfinite(a))) for a in attn_all)
    # attention rows are proper distributions (exact softmax reciprocal)
    row_sums = jnp.sum(attn_all[0], axis=-1)
    assert bool(jnp.all(jnp.abs(row_sums - 1.0) < 1e-3))

    print("KERNEL_OK")
</pallas_src>

<mosaic_0001>
module attributes {stable_mosaic.version = 11 : i64} {
  func.func @_layernorm_kernel(%arg0: i32, %arg1: memref<16x32xf32, #tpu.memory_space<vmem>>, %arg2: memref<1x32xf32, #tpu.memory_space<vmem>>, %arg3: memref<1x32xf32, #tpu.memory_space<vmem>>, %arg4: memref<16x32xf32, #tpu.memory_space<vmem>>) attributes {dimension_semantics = [#tpu.dimension_semantics<parallel>], iteration_bounds = array<i64: 1>, scalar_prefetch = 0 : i64, scratch_operands = 0 : i64, tpu.core_type = #tpu.core_type<tc>, window_params = [{transform_indices = @transform_0, window_bounds = array<i64: 16, 32>}, {pipeline_mode = #tpu.pipeline_mode<synchronous>, transform_indices = @transform_1, window_bounds = array<i64: 1, 32>}, {pipeline_mode = #tpu.pipeline_mode<synchronous>, transform_indices = @transform_2, window_bounds = array<i64: 1, 32>}, {transform_indices = @transform_3, window_bounds = array<i64: 16, 32>}]} {
    %c0 = arith.constant 0 : index
    %c0_0 = arith.constant 0 : index
    %0 = vector.load %arg1[%c0, %c0_0] : memref<16x32xf32, #tpu.memory_space<vmem>>, vector<16x32xf32>
    %cst = arith.constant dense<0.000000e+00> : vector<16xf32>
    %1 = vector.multi_reduction <add>, %0, %cst [1] : vector<16x32xf32> to vector<16xf32>
    %2 = vector.shape_cast %1 : vector<16xf32> to vector<16x1xf32>
    %cst_1 = arith.constant 3.200000e+01 : f32
    %3 = vector.broadcast %cst_1 : f32 to vector<16x1xf32>
    %4 = arith.divf %2, %3 : vector<16x1xf32>
    %5 = vector.broadcast %4 : vector<16x1xf32> to vector<16x32xf32>
    %6 = arith.subf %0, %5 : vector<16x32xf32>
    %7 = arith.mulf %6, %6 : vector<16x32xf32>
    %cst_2 = arith.constant dense<0.000000e+00> : vector<16xf32>
    %8 = vector.multi_reduction <add>, %7, %cst_2 [1] : vector<16x32xf32> to vector<16xf32>
    %9 = vector.shape_cast %8 : vector<16xf32> to vector<16x1xf32>
    %cst_3 = arith.constant 3.200000e+01 : f32
    %10 = vector.broadcast %cst_3 : f32 to vector<16x1xf32>
    %11 = arith.divf %9, %10 : vector<16x1xf32>
    %12 = vector.broadcast %4 : vector<16x1xf32> to vector<16x32xf32>
    %13 = arith.subf %0, %12 : vector<16x32xf32>
    %cst_4 = arith.constant 9.99999974E-6 : f32
    %14 = vector.broadcast %cst_4 : f32 to vector<16x1xf32>
    %15 = arith.addf %11, %14 : vector<16x1xf32>
    %16 = math.rsqrt %15 : vector<16x1xf32>
    %17 = vector.broadcast %16 : vector<16x1xf32> to vector<16x32xf32>
    %18 = arith.mulf %13, %17 : vector<16x32xf32>
    %c0_5 = arith.constant 0 : index
    %c0_6 = arith.constant 0 : index
    %19 = vector.load %arg2[%c0_5, %c0_6] : memref<1x32xf32, #tpu.memory_space<vmem>>, vector<1x32xf32>
    %20 = vector.broadcast %19 : vector<1x32xf32> to vector<16x32xf32>
    %21 = arith.mulf %18, %20 : vector<16x32xf32>
    %c0_7 = arith.constant 0 : index
    %c0_8 = arith.constant 0 : index
    %22 = vector.load %arg3[%c0_7, %c0_8] : memref<1x32xf32, #tpu.memory_space<vmem>>, vector<1x32xf32>
    %23 = vector.broadcast %22 : vector<1x32xf32> to vector<16x32xf32>
    %24 = arith.addf %21, %23 : vector<16x32xf32>
    %c0_9 = arith.constant 0 : index
    %c0_10 = arith.constant 0 : index
    %25 = vector.load %arg4[%c0_9, %c0_10] : memref<16x32xf32, #tpu.memory_space<vmem>>, vector<16x32xf32>
    tpu.vector_store %arg4[%c0_9, %c0_10], %24 {strides = array<i32>} : memref<16x32xf32, #tpu.memory_space<vmem>>, vector<16x32xf32>,
    return
  }
  func.func @transform_0(%arg0: i32) -> (i32, i32) {
    %c0_i32 = arith.constant 0 : i32
    %c0_i32_0 = arith.constant 0 : i32
    return %arg0, %c0_i32 : i32, i32
  }
  func.func @transform_1(%arg0: i32) -> (i32, i32) {
    %c0_i32 = arith.constant 0 : i32
    %c0_i32_0 = arith.constant 0 : i32
    %c0_i32_1 = arith.constant 0 : i32
    return %c0_i32, %c0_i32_0 : i32, i32
  }
  func.func @transform_2(%arg0: i32) -> (i32, i32) {
    %c0_i32 = arith.constant 0 : i32
    %c0_i32_0 = arith.constant 0 : i32
    %c0_i32_1 = arith.constant 0 : i32
    return %c0_i32, %c0_i32_0 : i32, i32
  }
  func.func @transform_3(%arg0: i32) -> (i32, i32) {
    %c0_i32 = arith.constant 0 : i32
    %c0_i32_0 = arith.constant 0 : i32
    return %arg0, %c0_i32 : i32, i32
  }
}

</mosaic_0001>

<llo_original>
// kernel: tpu_custom_call.1
$region0: #{tpu_custom_call.1}
  #allocation0 [shape = 'u32[]', space=smem, size = 0x4, offset = 0x4, fixed_abs, tag = 'smem constant byte address 0x4 - core index']
  #allocation1 [shape = 'u32[144,128]{1,0:T(1,128)}', space=vmem, size = 0x12000, scoped, tag = 'internal scratch']
  %s0 = inlined_call_operand.hbm [shape: f32[16,32], index: 0, kind: input, shape index: {}]
  %s1 = inlined_call_operand.vmem [shape: f32[1,32], index: 1, kind: input, shape index: {}]
  %s2 = inlined_call_operand.vmem [shape: f32[1,32], index: 2, kind: input, shape index: {}]
  %s3 = inlined_call_operand.hbm [shape: f32[16,32], index: 3, kind: output, shape index: {}]
  %s4 = sld [smem:[#allocation0]]
  $region26: #{tpu_custom_call.1} parent=0
    _
  %s6 = ssub.s32 1, %s4
  %s7 = scalar_select 0, %s6, %s4
  $region1: #{tpu_custom_call.1} parent=0
    #allocation2 [shape = 'u8[8192]{0}', space=vmem, size = 0x2000, scoped, tag = 'input window, operand 0, single buffered']
    #allocation3 [shape = 's32[1]{0}', space=sflag, size = 0x4, scoped, tag = 'scoped memory for tpu_custom_call.1']
    #allocation4 [shape = 's32[1]{0}', space=sflag, size = 0x4, scoped, tag = 'scoped memory for tpu_custom_call.1']
    #allocation5 [shape = 'u8[8192]{0}', space=vmem, size = 0x2000, scoped, tag = 'output window, operand 0, single buffered']
    %8 = vsyncpa [#allocation3], 0
    %9 = vsyncpa [#allocation4], 0
    // Predicated region
    $region2: #{tpu_custom_call.1} parent=1 // pred_check
      _
    $region3: #{tpu_custom_call.1} parent=1 // pred_check_branch
      %11 = sbr.rel (0) target = $region5
    $region4: #{tpu_custom_call.1} parent=1 // pred_region
      %s13 = ssub.s32 256, 256
      %14 = vsyncadd [#allocation3], %s13
      %s15 = sshll.u32 [#allocation2], 4
      %s16 = int_to_ptr.vmem [resolvable:$true] %s15
      %21 = dma.hbm_to_vmem [thread:$0]  %s0, 256, %s16, [#allocation3], 128, 128, 8
    $region5: #{tpu_custom_call.1} parent=1 // pred_fallthru
      _
    // Predicated region
    $region6: #{tpu_custom_call.1} parent=1 // pred_check
      _
    $region7: #{tpu_custom_call.1} parent=1 // pred_check_branch
      %23 = sbr.rel (0) target = $region9
    $region8: #{tpu_custom_call.1} parent=1 // pred_region
      _
    $region9: #{tpu_custom_call.1} parent=1 // pred_fallthru
      _
    // Predicated region
    $region10: #{tpu_custom_call.1} parent=1 // pred_check
      _
    $region11: #{tpu_custom_call.1} parent=1 // pred_check_branch
      %25 = sbr.rel (0) target = $region13
    $region12: #{tpu_custom_call.1} parent=1 // pred_region
      _
    $region13: #{tpu_custom_call.1} parent=1 // pred_fallthru
      _
    // Predicated region
    $region14: #{tpu_custom_call.1} parent=1 // pred_check
      _
    $region15: #{tpu_custom_call.1} parent=1 // pred_check_branch
      %27 = sbr.rel (0) target = $region17
    $region16: #{tpu_custom_call.1} parent=1 // pred_region
      %28 = dma.done [#allocation3], 256
    $region17: #{tpu_custom_call.1} parent=1 // pred_fallthru
      _
    %v29 = vld [vmem:[#allocation2] sm:$0xff]
    %v30 = vld [vmem:[#allocation2 + $0x8] sm:$0xff]
    %vm31 = vcmask 261120
    %v32 = vsel %vm31, %v29, 0.0
    %33 = vadd.xlane.f32.xlu0 %v32
    %v34 = vpop.xlane.xlu0 %33
    %v35 = vsel %vm31, %v30, 0.0
    %36 = vadd.xlane.f32.xlu0 %v35
    %v37 = vpop.xlane.xlu0 %36
    %v38 = vrcp.pop 32.0
    %v39 = vmul.f32 %v34, %v38
    %v40 = vmul.f32 %v37, %v38
    %v41 = vsub.f32 %v29, %v39
    %v42 = vsub.f32 %v30, %v40
    %v43 = vmul.f32 %v41, %v41
    %v44 = vmul.f32 %v42, %v42
    %v45 = vsel %vm31, %v43, 0.0
    %46 = vadd.xlane.f32.xlu0 %v45
    %v47 = vpop.xlane.xlu0 %46
    %v48 = vsel %vm31, %v44, 0.0
    %49 = vadd.xlane.f32.xlu0 %v48
    %v50 = vpop.xlane.xlu0 %49
    %v51 = vmul.f32 %v47, %v38
    %v52 = vmul.f32 %v50, %v38
    %v53 = vadd.f32 %v51, 1e-05
    %v54 = vadd.f32 %v52, 1e-05
    %v55 = vrsqrt.pop %v53
    %v56 = vrsqrt.pop %v54
    %v57 = vmul.f32 %v41, %v55
    %v58 = vmul.f32 %v42, %v56
    %v59 = vld [vmem:[%s1] sm:$0x1]
    %v61 = vlaneseq
    %v62 = vshrl.u32 %v61, 7
    %v63 = vsub.s32 0, %v62
    %v64 = vrot.slane %v59, %v63
    %v66 = vmul.f32 %v57, %v64
    %v67 = vmul.f32 %v58, %v64
    %v68 = vld [vmem:[%s2] sm:$0x1]
    %v70 = vlaneseq
    %v71 = vshrl.u32 %v70, 7
    %v72 = vsub.s32 0, %v71
    %v73 = vrot.slane %v68, %v72
    %v75 = vadd.f32 %v66, %v73
    %v76 = vadd.f32 %v67, %v73
    %77 = vst.msk [vmem:[#allocation5] sm:$0xff] %vm31, %v75
    %78 = vst.msk [vmem:[#allocation5 + $0x8] sm:$0xff] %vm31, %v76
    // Predicated region
    $region18: #{tpu_custom_call.1} parent=1 // pred_check
      _
    $region19: #{tpu_custom_call.1} parent=1 // pred_check_branch
      %80 = sbr.rel (0) target = $region21
    $region20: #{tpu_custom_call.1} parent=1 // pred_region
      %s82 = ssub.s32 256, 256
      %83 = vsyncadd [#allocation4], %s82
      %s84 = sshll.u32 [#allocation5], 4
      %s85 = int_to_ptr.vmem [resolvable:$true] %s84
      %90 = dma.vmem_to_hbm [thread:$0]  %s85, 256, %s3, [#allocation4], 128, 128, 8
    $region21: #{tpu_custom_call.1} parent=1 // pred_fallthru
      _
    // Predicated region
    $region22: #{tpu_custom_call.1} parent=1 // pred_check
      _
    $region23: #{tpu_custom_call.1} parent=1 // pred_check_branch
      %92 = sbr.rel (0) target = $region25
    $region24: #{tpu_custom_call.1} parent=1 // pred_region
      %93 = dma.done [#allocation4], 256
    $region25: #{tpu_custom_call.1} parent=1 // pred_fallthru
      _
    %94 = vsyncpa [#allocation3], 1
    %95 = vsyncpa [#allocation4], 1

</llo_original>
